<compile_context>
chip_gen: v7x
topology: tpu7x:2x2x1
jax: 0.10.0
libtpu: 0.0.40
codegen_flags: <defaults>
</compile_context>

<pallas_src>
import functools

import jax
import jax.numpy as jnp
from jax.experimental import pallas as pl
from jax.experimental.pallas import tpu as pltpu

INV_SQRT2 = 0.7071067811865476
_MIB = 1024 * 1024


def _round_up(x: int, m: int) -> int:
    return ((x + m - 1) // m) * m


@functools.lru_cache(maxsize=None)
def _vmem_capacity_bytes() -> int:
    """Physical VMEM per TensorCore; conservative fallback if the query is unavailable."""
    try:
        cap = getattr(pltpu.get_tpu_info(), "vmem_capacity_bytes", None)
        if cap:
            return int(cap)
    except Exception:
        pass
    return 128 * _MIB  # v5e/v6e physical size


def _footprint_bytes(tm, d_in, hc, d_out, x_bytes, out_bytes, c_bytes) -> int:
    """Estimated VMEM footprint of one pipeline configuration (2-deep buffering)."""
    return (
        2 * tm * d_in * x_bytes                    # x tile (double-buffered)
        + 2 * tm * d_out * out_bytes               # out tile (double-buffered)
        + 2 * (d_in * hc + hc * d_out) * c_bytes   # w1 / w2 chunks (double-buffered)
        + 2 * (hc + d_out) * 4                     # b1 chunk / b2 (f32)
        + tm * d_out * 4                           # f32 accumulator scratch
        + 2 * tm * hc * 4                          # live f32 intermediate (h + GELU temp)
        + tm * d_out * 4                           # matmul2 partial before accumulate
    )


def _plan_tiles(M, d_in, H, d_out, x_bytes, out_bytes, c_bytes, budget, tm_pref):
    """Pick (row tile, hidden chunk).  Prefer fully-resident weights (chunk == H, no
    restreaming); otherwise stream the hidden dim in 256-aligned chunks; shrink the
    row tile only as a last resort."""
    m_cap = _round_up(max(M, 1), 8)
    for tm in (tm_pref, 512, 256, 128, 64, 32, 16, 8):
        if tm > tm_pref:
            continue
        tm_eff = min(tm, m_cap)
        if _footprint_bytes(tm_eff, d_in, H, d_out, x_bytes, out_bytes, c_bytes) <= budget:
            return tm_eff, H  # fast path: single chunk, weights resident across the row grid
        hc_start = min(2048, (H - 1) // 256 * 256)
        for hc in range(hc_start, 0, -256):
            if _footprint_bytes(tm_eff, d_in, hc, d_out, x_bytes, out_bytes, c_bytes) <= budget:
                return tm_eff, hc
    return min(8, m_cap), min(256, H)


def _mlp_kernel(x_ref, w1_ref, b1_ref, w2_ref, b2_ref, o_ref, acc_ref):
    h_idx = pl.program_id(1)

    @pl.when(h_idx == 0)
    def _():
        acc_ref[...] = jnp.zeros_like(acc_ref)

    # Matmul 1 on the MXU (compute dtype, f32 accumulation); bias add in f32.
    x = x_ref[...].astype(w1_ref.dtype)
    h = jnp.dot(x, w1_ref[...], preferred_element_type=jnp.float32)
    h = h + b1_ref[...]
    # Exact (erf-based) GELU in f32, matching torch nn.GELU() default.
    h = 0.5 * h * (1.0 + jax.lax.erf(h * INV_SQRT2))
    # Matmul 2: accumulate this hidden chunk's contribution in f32.
    acc_ref[...] += jnp.dot(
        h.astype(w2_ref.dtype), w2_ref[...], preferred_element_type=jnp.float32
    )

    @pl.when(h_idx == pl.num_programs(1) - 1)
    def _():
        o_ref[...] = (acc_ref[...] + b2_ref[...]).astype(o_ref.dtype)


@functools.partial(jax.jit, static_argnames=("tm", "use_bf16"))
def mlp_block(x, w1, b1, w2, b2, *, tm=512, use_bf16=True):
    """x: [B, S, D_in]; w1: [D_in, H]; b1: [H]; w2: [H, D_out]; b2: [D_out]."""
    B, S, D_in = x.shape
    H = w1.shape[1]
    D_out = w2.shape[1]
    M = B * S

    out_dtype = x.dtype
    compute_dtype = jnp.bfloat16 if use_bf16 else w1.dtype

    x_bytes = jnp.dtype(x.dtype).itemsize
    out_bytes = jnp.dtype(out_dtype).itemsize
    c_bytes = jnp.dtype(compute_dtype).itemsize

    # Generation-aware VMEM budget.
    capacity = _vmem_capacity_bytes()
    hard_cap = max(32 * _MIB, int(0.85 * capacity))

    tm_eff, hc = _plan_tiles(M, D_in, H, D_out, x_bytes, out_bytes, c_bytes, hard_cap, tm)
    need = _footprint_bytes(tm_eff, D_in, hc, D_out, x_bytes, out_bytes, c_bytes)
    vmem_limit = min(hard_cap, max(32 * _MIB, int(1.25 * need)))

    # Hidden dim is zero-padded only when it is streamed in chunks (padding contributes 0).
    H_p = _round_up(H, hc)
    grid_m = pl.cdiv(M, tm_eff)
    grid_h = H_p // hc

    # No row/feature padding of x or the output: ragged M -> boundary blocks (garbage
    # rows are discarded by the masked boundary store); D_in / D_out use full-dim blocks.
    x2d = x.reshape(M, D_in)

    w1_p = w1 if H_p == H else jnp.pad(w1, ((0, 0), (0, H_p - H)))
    w2_p = w2 if H_p == H else jnp.pad(w2, ((0, H_p - H), (0, 0)))
    b1_p = (b1 if H_p == H else jnp.pad(b1, (0, H_p - H))).reshape(1, H_p)
    w1_p = w1_p.astype(compute_dtype)
    w2_p = w2_p.astype(compute_dtype)
    b1_p = b1_p.astype(jnp.float32)
    b2_p = b2.reshape(1, D_out).astype(jnp.float32)

    # Weights are fetched once when grid_h == 1 (constant index map); restreamed per
    # row tile when the hidden dim is chunked.
    weight_passes = 1 if grid_h == 1 else grid_m
    cost = pl.CostEstimate(
        flops=2 * M * (D_in * H + H * D_out),
        transcendentals=M * H,
        bytes_accessed=(
            M * D_in * x_bytes
            + weight_passes * (D_in * H_p + H_p * D_out) * c_bytes
            + (H_p + D_out) * 4
            + M * D_out * out_bytes
        ),
    )

    out2d = pl.pallas_call(
        _mlp_kernel,
        out_shape=jax.ShapeDtypeStruct((M, D_out), out_dtype),
        grid_spec=pltpu.PrefetchScalarGridSpec(
            num_scalar_prefetch=0,
            grid=(grid_m, grid_h),
            in_specs=[
                pl.BlockSpec((tm_eff, D_in), lambda m, h: (m, 0)),
                pl.BlockSpec((D_in, hc), lambda m, h: (0, h)),
                pl.BlockSpec((1, hc), lambda m, h: (0, h)),
                pl.BlockSpec((hc, D_out), lambda m, h: (h, 0)),
                pl.BlockSpec((1, D_out), lambda m, h: (0, 0)),
            ],
            out_specs=pl.BlockSpec((tm_eff, D_out), lambda m, h: (m, 0)),
            scratch_shapes=[pltpu.VMEM((tm_eff, D_out), jnp.float32)],
        ),
        compiler_params=pltpu.CompilerParams(
            dimension_semantics=("parallel", "arbitrary"),
            vmem_limit_bytes=vmem_limit,
        ),
        cost_estimate=cost,
    )(x2d, w1_p, b1_p, w2_p, b2_p)

    return out2d.reshape(B, S, D_out)


def _reference(x, w1, b1, w2, b2, compute_dtype=jnp.float32):
    cd = compute_dtype
    h = jnp.dot(x.astype(cd), w1.astype(cd), preferred_element_type=jnp.float32) + b1
    h = 0.5 * h * (1.0 + jax.lax.erf(h * INV_SQRT2))
    out = jnp.dot(h.astype(cd), w2.astype(cd), preferred_element_type=jnp.float32) + b2
    return out.astype(x.dtype)


if __name__ == "__main__":
    # Module config: input_dim=32, hidden_dim=64, output_dim=32, dropout=0.1 (eval -> identity)
    B, S = 2, 8
    D_IN, HID, D_OUT = 32, 64, 32

    key = jax.random.PRNGKey(0)
    kx, k1, k2, k3, k4 = jax.random.split(key, 5)

    x = jax.random.normal(kx, (B, S, D_IN), dtype=jnp.float32)

    # Deterministic parameter init (PyTorch Linear stores weight as [out, in]; we keep
    # the transposed [in, out] layout for the kernel's row-major matmuls).
    bound1 = 1.0 / jnp.sqrt(D_IN)
    w1 = jax.random.uniform(k1, (D_IN, HID), jnp.float32, -bound1, bound1)
    b1 = jax.random.uniform(k2, (HID,), jnp.float32, -bound1, bound1)
    bound2 = 1.0 / jnp.sqrt(HID)
    w2 = jax.random.uniform(k3, (HID, D_OUT), jnp.float32, -bound2, bound2)
    b2 = jax.random.uniform(k4, (D_OUT,), jnp.float32, -bound2, bound2)

    out = mlp_block(x, w1, b1, w2, b2)
    out = jax.block_until_ready(out)
    assert out.shape == (B, S, D_OUT)

    # Strict check against a reference with the same bf16-matmul / f32-accumulate numerics.
    ref_bf16 = _reference(x, w1, b1, w2, b2, compute_dtype=jnp.bfloat16)
    assert jnp.allclose(out, ref_bf16, atol=5e-3, rtol=5e-3), "mismatch vs bf16 reference"

    # Loose sanity check against the pure-f32 forward (bf16 rounding error budget).
    ref_f32 = _reference(x, w1, b1, w2, b2, compute_dtype=jnp.float32)
    assert jnp.allclose(out, ref_f32, atol=5e-2, rtol=5e-2), "mismatch vs f32 reference"

    print("KERNEL_OK")
</pallas_src>

<mosaic_0001>
module attributes {stable_mosaic.version = 11 : i64} {
  func.func @_mlp_kernel(%arg0: i32, %arg1: i32, %arg2: memref<16x32xf32, #tpu.memory_space<vmem>>, %arg3: memref<32x64xbf16, #tpu.memory_space<vmem>>, %arg4: memref<1x64xf32, #tpu.memory_space<vmem>>, %arg5: memref<64x32xbf16, #tpu.memory_space<vmem>>, %arg6: memref<1x32xf32, #tpu.memory_space<vmem>>, %arg7: memref<16x32xf32, #tpu.memory_space<vmem>>, %arg8: memref<16x32xf32, #tpu.memory_space<vmem>>) attributes {dimension_semantics = [#tpu.dimension_semantics<parallel>, #tpu.dimension_semantics<arbitrary>], iteration_bounds = array<i64: 1, 1>, scalar_prefetch = 0 : i64, scratch_operands = 1 : i64, tpu.core_type = #tpu.core_type<tc>, window_params = [{transform_indices = @transform_0, window_bounds = array<i64: 16, 32>}, {transform_indices = @transform_1, window_bounds = array<i64: 32, 64>}, {transform_indices = @transform_2, window_bounds = array<i64: 1, 64>}, {transform_indices = @transform_3, window_bounds = array<i64: 64, 32>}, {pipeline_mode = #tpu.pipeline_mode<synchronous>, transform_indices = @transform_4, window_bounds = array<i64: 1, 32>}, {transform_indices = @transform_5, window_bounds = array<i64: 16, 32>}]} {
    %c0_i32 = arith.constant 0 : i32
    %0 = arith.cmpi eq, %arg1, %c0_i32 : i32
    %1 = arith.extui %0 : i1 to i32
    %c0_i32_0 = arith.constant 0 : i32
    %2 = arith.cmpi ne, %1, %c0_i32_0 : i32
    scf.if %2 {
      %cst_18 = arith.constant 0.000000e+00 : f32
      %27 = vector.broadcast %cst_18 : f32 to vector<16x32xf32>
      %c0_19 = arith.constant 0 : index
      %c0_20 = arith.constant 0 : index
      %28 = vector.load %arg8[%c0_19, %c0_20] : memref<16x32xf32, #tpu.memory_space<vmem>>, vector<16x32xf32>
      tpu.vector_store %arg8[%c0_19, %c0_20], %27 {strides = array<i32>} : memref<16x32xf32, #tpu.memory_space<vmem>>, vector<16x32xf32>,
    } else {
    }
    %c0 = arith.constant 0 : index
    %c0_1 = arith.constant 0 : index
    %3 = vector.load %arg2[%c0, %c0_1] : memref<16x32xf32, #tpu.memory_space<vmem>>, vector<16x32xf32>
    %4 = arith.truncf %3 : vector<16x32xf32> to vector<16x32xbf16>
    %c0_2 = arith.constant 0 : index
    %c0_3 = arith.constant 0 : index
    %5 = vector.load %arg3[%c0_2, %c0_3] : memref<32x64xbf16, #tpu.memory_space<vmem>>, vector<32x64xbf16>
    %cst = arith.constant dense<0.000000e+00> : vector<16x64xf32>
    %6 = tpu.matmul %4, %5, %cst {dimension_numbers = #tpu.dot_dimension_numbers<[1], [0], [0], [1], [0, 0, 1, 1], [], []>} : vector<16x32xbf16>, vector<32x64xbf16>, vector<16x64xf32> -> vector<16x64xf32>
    %c0_4 = arith.constant 0 : index
    %c0_5 = arith.constant 0 : index
    %7 = vector.load %arg4[%c0_4, %c0_5] : memref<1x64xf32, #tpu.memory_space<vmem>>, vector<1x64xf32>
    %8 = vector.broadcast %7 : vector<1x64xf32> to vector<16x64xf32>
    %9 = arith.addf %6, %8 : vector<16x64xf32>
    %cst_6 = arith.constant 5.000000e-01 : f32
    %10 = vector.broadcast %cst_6 : f32 to vector<16x64xf32>
    %11 = arith.mulf %10, %9 : vector<16x64xf32>
    %cst_7 = arith.constant 0.707106769 : f32
    %12 = vector.broadcast %cst_7 : f32 to vector<16x64xf32>
    %13 = arith.mulf %9, %12 : vector<16x64xf32>
    %14 = math.erf %13 : vector<16x64xf32>
    %cst_8 = arith.constant 1.000000e+00 : f32
    %15 = vector.broadcast %cst_8 : f32 to vector<16x64xf32>
    %16 = arith.addf %15, %14 : vector<16x64xf32>
    %17 = arith.mulf %11, %16 : vector<16x64xf32>
    %c0_9 = arith.constant 0 : index
    %c0_10 = arith.constant 0 : index
    %18 = vector.load %arg8[%c0_9, %c0_10] : memref<16x32xf32, #tpu.memory_space<vmem>>, vector<16x32xf32>
    %19 = arith.truncf %17 : vector<16x64xf32> to vector<16x64xbf16>
    %c0_11 = arith.constant 0 : index
    %c0_12 = arith.constant 0 : index
    %20 = vector.load %arg5[%c0_11, %c0_12] : memref<64x32xbf16, #tpu.memory_space<vmem>>, vector<64x32xbf16>
    %cst_13 = arith.constant dense<0.000000e+00> : vector<16x32xf32>
    %21 = tpu.matmul %19, %20, %cst_13 {dimension_numbers = #tpu.dot_dimension_numbers<[1], [0], [0], [1], [0, 0, 1, 1], [], []>} : vector<16x64xbf16>, vector<64x32xbf16>, vector<16x32xf32> -> vector<16x32xf32>
    %22 = arith.addf %18, %21 : vector<16x32xf32>
    %c0_14 = arith.constant 0 : index
    %c0_15 = arith.constant 0 : index
    %23 = vector.load %arg8[%c0_14, %c0_15] : memref<16x32xf32, #tpu.memory_space<vmem>>, vector<16x32xf32>
    tpu.vector_store %arg8[%c0_14, %c0_15], %22 {strides = array<i32>} : memref<16x32xf32, #tpu.memory_space<vmem>>, vector<16x32xf32>,
    %c0_i32_16 = arith.constant 0 : i32
    %24 = arith.cmpi eq, %arg1, %c0_i32_16 : i32
    %25 = arith.extui %24 : i1 to i32
    %c0_i32_17 = arith.constant 0 : i32
    %26 = arith.cmpi ne, %25, %c0_i32_17 : i32
    scf.if %26 {
      %c0_18 = arith.constant 0 : index
      %c0_19 = arith.constant 0 : index
      %27 = vector.load %arg8[%c0_18, %c0_19] : memref<16x32xf32, #tpu.memory_space<vmem>>, vector<16x32xf32>
      %c0_20 = arith.constant 0 : index
      %c0_21 = arith.constant 0 : index
      %28 = vector.load %arg6[%c0_20, %c0_21] : memref<1x32xf32, #tpu.memory_space<vmem>>, vector<1x32xf32>
      %29 = vector.broadcast %28 : vector<1x32xf32> to vector<16x32xf32>
      %30 = arith.addf %27, %29 : vector<16x32xf32>
      %c0_22 = arith.constant 0 : index
      %c0_23 = arith.constant 0 : index
      %31 = vector.load %arg7[%c0_22, %c0_23] : memref<16x32xf32, #tpu.memory_space<vmem>>, vector<16x32xf32>
      tpu.vector_store %arg7[%c0_22, %c0_23], %30 {strides = array<i32>} : memref<16x32xf32, #tpu.memory_space<vmem>>, vector<16x32xf32>,
    } else {
    }
    return
  }
  func.func @transform_0(%arg0: i32, %arg1: i32) -> (i32, i32) {
    %c0_i32 = arith.constant 0 : i32
    %c0_i32_0 = arith.constant 0 : i32
    return %arg0, %c0_i32 : i32, i32
  }
  func.func @transform_1(%arg0: i32, %arg1: i32) -> (i32, i32) {
    %c0_i32 = arith.constant 0 : i32
    %c0_i32_0 = arith.constant 0 : i32
    return %c0_i32, %arg1 : i32, i32
  }
  func.func @transform_2(%arg0: i32, %arg1: i32) -> (i32, i32) {
    %c0_i32 = arith.constant 0 : i32
    %c0_i32_0 = arith.constant 0 : i32
    return %c0_i32, %arg1 : i32, i32
  }
  func.func @transform_3(%arg0: i32, %arg1: i32) -> (i32, i32) {
    %c0_i32 = arith.constant 0 : i32
    %c0_i32_0 = arith.constant 0 : i32
    return %arg1, %c0_i32 : i32, i32
  }
  func.func @transform_4(%arg0: i32, %arg1: i32) -> (i32, i32) {
    %c0_i32 = arith.constant 0 : i32
    %c0_i32_0 = arith.constant 0 : i32
    %c0_i32_1 = arith.constant 0 : i32
    return %c0_i32, %c0_i32_0 : i32, i32
  }
  func.func @transform_5(%arg0: i32, %arg1: i32) -> (i32, i32) {
    %c0_i32 = arith.constant 0 : i32
    %c0_i32_0 = arith.constant 0 : i32
    return %arg0, %c0_i32 : i32, i32
  }
}

</mosaic_0001>

<llo_original>
// kernel: mlp_block.1
$region0: #{mlp_block.1}
  #allocation0 [shape = 'u32[]', space=smem, size = 0x4, offset = 0x4, fixed_abs, tag = 'smem constant byte address 0x4 - core index']
  #allocation1 [shape = 'u32[144,128]{1,0:T(1,128)}', space=vmem, size = 0x12000, scoped, tag = 'internal scratch']
  #allocation2 [shape = 'f32[16,32]{1,0:T(8,128)}', space=vmem, size = 0x2000, scoped, tag = 'scratch operand']
  %s0 = inlined_call_operand.vmem [shape: f32[16,32], index: 0, kind: input, shape index: {}]
  %s1 = inlined_call_operand.vmem [shape: bf16[32,64], index: 1, kind: input, shape index: {}]
  %s2 = inlined_call_operand.vmem [shape: f32[1,64], index: 2, kind: input, shape index: {}]
  %s3 = inlined_call_operand.vmem [shape: bf16[64,32], index: 3, kind: input, shape index: {}]
  %s4 = inlined_call_operand.vmem [shape: f32[1,32], index: 4, kind: input, shape index: {}]
  %s5 = inlined_call_operand.hbm [shape: f32[16,32], index: 5, kind: output, shape index: {}]
  %s6 = sld [smem:[#allocation0]]
  $region38: #{mlp_block.1} parent=0
    _
  %s8 = ssub.s32 1, %s6
  %s9 = scalar_select 0, %s8, %s6
  $region1: #{mlp_block.1} parent=0
    #allocation3 [shape = 'u8[8192]{0}', space=vmem, size = 0x2000, scoped, tag = 'output window, operand 0, single buffered']
    #allocation4 [shape = 's32[1]{0}', space=sflag, size = 0x4, scoped, tag = 'scoped memory for mlp_block.1']
    %10 = vsyncpa [#allocation4], 0
    // Predicated region
    $region2: #{mlp_block.1} parent=1 // pred_check
      _
    $region3: #{mlp_block.1} parent=1 // pred_check_branch
      %12 = sbr.rel (0) target = $region5
    $region4: #{mlp_block.1} parent=1 // pred_region
      _
    $region5: #{mlp_block.1} parent=1 // pred_fallthru
      _
    // Predicated region
    $region6: #{mlp_block.1} parent=1 // pred_check
      _
    $region7: #{mlp_block.1} parent=1 // pred_check_branch
      %14 = sbr.rel (0) target = $region9
    $region8: #{mlp_block.1} parent=1 // pred_region
      _
    $region9: #{mlp_block.1} parent=1 // pred_fallthru
      _
    // Predicated region
    $region10: #{mlp_block.1} parent=1 // pred_check
      _
    $region11: #{mlp_block.1} parent=1 // pred_check_branch
      %16 = sbr.rel (0) target = $region13
    $region12: #{mlp_block.1} parent=1 // pred_region
      _
    $region13: #{mlp_block.1} parent=1 // pred_fallthru
      _
    // Predicated region
    $region14: #{mlp_block.1} parent=1 // pred_check
      _
    $region15: #{mlp_block.1} parent=1 // pred_check_branch
      %18 = sbr.rel (0) target = $region17
    $region16: #{mlp_block.1} parent=1 // pred_region
      _
    $region17: #{mlp_block.1} parent=1 // pred_fallthru
      _
    // Predicated region
    $region18: #{mlp_block.1} parent=1 // pred_check
      _
    $region19: #{mlp_block.1} parent=1 // pred_check_branch
      %20 = sbr.rel (0) target = $region21
    $region20: #{mlp_block.1} parent=1 // pred_region
      _
    $region21: #{mlp_block.1} parent=1 // pred_fallthru
      _
    %p22 = scmp.eq.s32.totalorder 0, 0
    // Predicated region
    $region22: #{mlp_block.1} parent=1 // pred_check
      %p23 = pneg %p22
    $region23: #{mlp_block.1} parent=1 // pred_check_branch
      %25 = sbr.rel (%p23) target = $region25
    $region24: #{mlp_block.1} parent=1 // pred_region
      %vm26 = vcmask 261120
      %27 = vst.msk [vmem:[#allocation2] sm:$0xff] %vm26, 0.0
      %28 = vst.msk [vmem:[#allocation2 + $0x8] sm:$0xff] %vm26, 0.0
    $region25: #{mlp_block.1} parent=1 // pred_fallthru
      _
    %v29 = vld [vmem:[%s0] sm:$0xff]
    %v30 = vld [vmem:[%s0 + $0x8] sm:$0xff]
    %v31 = vpack.c.bf16 %v30, %v29
    %v32 = vld [vmem:[%s1] sm:$0xf]
    %v33 = vld [vmem:[%s1 + $0x4] sm:$0xf]
    %v34 = vld [vmem:[%s1 + $0x8] sm:$0xf]
    %v35 = vld [vmem:[%s1 + $0xc] sm:$0xf]
    %v36 = vld [vmem:[%s2] sm:$0x1]
    %v38 = vlaneseq
    %v39 = vshrl.u32 %v38, 7
    %v40 = vsub.s32 0, %v39
    %v41 = vrot.slane %v36, %v40
    %v47 = vunpack.c.l.b16 %v32
    %v48 = vunpack.c.l.b16 %v33
    %v49 = vunpack.c.l.b16 %v34
    %v50 = vunpack.c.l.b16 %v35
    %v51 = vpack.c.b16 %v48, %v47
    %v52 = vpack.c.b16 %v50, %v49
    %vm55 = vcmask 261120
    %v57 = vsel %vm55, %v31, 0
    %59 = vmatprep.subr.bf16.mxu0 0
    %60 = vmatpush1.bf16.msra.mxu0 %v51
    %61 = vmatprep.subr.bf16.mxu0 0
    %62 = vmatpush1.bf16.msra.mxu0 %v52
    %63 = vmatprep.subr.bf16.mxu0 0
    %64 = vmatpush1.bf16.msra.mxu0 0
    %65 = vmatprep.subr.bf16.mxu0 0
    %66 = vmatpush1.bf16.msra.mxu0 0
    %67 = vmatprep.subr.bf16.mxu0 0
    %68 = vmatpush1.bf16.msra.mxu0 0
    %69 = vmatprep.subr.bf16.mxu0 0
    %70 = vmatpush1.bf16.msra.mxu0 0
    %71 = vmatprep.subr.bf16.mxu0 0
    %72 = vmatpush1.bf16.msra.mxu0 0
    %73 = vmatprep.subr.bf16.mxu0 0
    %74 = vmatpush1.bf16.msra.mxu0 0
    %75 = vmatprep.subr.bf16.mxu0 0
    %76 = vmatpush1.bf16.msra.mxu0 0
    %77 = vmatprep.subr.bf16.mxu0 0
    %78 = vmatpush1.bf16.msra.mxu0 0
    %79 = vmatprep.subr.bf16.mxu0 0
    %80 = vmatpush1.bf16.msra.mxu0 0
    %81 = vmatprep.subr.bf16.mxu0 0
    %82 = vmatpush1.bf16.msra.mxu0 0
    %83 = vmatprep.subr.bf16.mxu0 0
    %84 = vmatpush1.bf16.msra.mxu0 0
    %85 = vmatprep.subr.bf16.mxu0 0
    %86 = vmatpush1.bf16.msra.mxu0 0
    %87 = vmatprep.subr.bf16.mxu0 0
    %88 = vmatpush1.bf16.msra.mxu0 0
    %89 = vmatprep.subr.bf16.mxu0 0
    %90 = vmatpush1.bf16.msra.mxu0 0
    %91 = vmatprep.mubr.bf16.mxu0 0
    %92 = vmatmul.mubr.bf16.gmra.mrb[0].mxu0 %v57
    %v93 = vpop.f32.mrb[0].mxu0
    %v94 = vadd.f32 %v41, %v93
    %v95 = vpop.f32.mrb[0].mxu0
    %v96 = vpop.f32.mrb[0].mxu0
    %v97 = vadd.f32 %v41, %v96
    %v98 = vpop.f32.mrb[0].mxu0
    %99 = vdwg.mxu0
    %v100 = vmul.f32 %v94, 0.5
    %v101 = vmul.f32 %v97, 0.5
    %v102 = vmul.f32 %v94, 0.70710677
    %v103 = vmul.f32 %v97, 0.70710677
    %v104 = verf.f32.pop %v102
    %v105 = verf.f32.pop %v103
    %v106 = vadd.f32 %v104, 1.0
    %v107 = vadd.f32 %v105, 1.0
    %v108 = vmul.f32 %v100, %v106
    %v109 = vmul.f32 %v101, %v107
    %v110 = vld [vmem:[#allocation2] sm:$0xff]
    %v111 = vld [vmem:[#allocation2 + $0x8] sm:$0xff]
    %v112 = vpack.c.bf16 %v109, %v108
    %v113 = vld [vmem:[%s3] sm:$0xf]
    %v114 = vld [vmem:[%s3 + $0x4] sm:$0xf]
    %v115 = vld [vmem:[%s3 + $0x8] sm:$0xf]
    %v116 = vld [vmem:[%s3 + $0xc] sm:$0xf]
    %v117 = vld [vmem:[%s3 + $0x10] sm:$0xf]
    %v118 = vld [vmem:[%s3 + $0x14] sm:$0xf]
    %v119 = vld [vmem:[%s3 + $0x18] sm:$0xf]
    %v120 = vld [vmem:[%s3 + $0x1c] sm:$0xf]
    %v129 = vunpack.c.l.b16 %v113
    %v130 = vunpack.c.l.b16 %v114
    %v131 = vunpack.c.l.b16 %v115
    %v132 = vunpack.c.l.b16 %v116
    %v133 = vunpack.c.l.b16 %v117
    %v134 = vunpack.c.l.b16 %v118
    %v135 = vunpack.c.l.b16 %v119
    %v136 = vunpack.c.l.b16 %v120
    %v137 = vpack.c.b16 %v130, %v129
    %v138 = vpack.c.b16 %v132, %v131
    %v139 = vpack.c.b16 %v134, %v133
    %v140 = vpack.c.b16 %v136, %v135
    %vm145 = vcmask 523264
    %v147 = vsel %vm145, %v112, 0
    %149 = vmatprep.subr.bf16.mxu0 0
    %150 = vmatpush1.bf16.msra.mxu0 %v137
    %151 = vmatprep.subr.bf16.mxu0 0
    %152 = vmatpush1.bf16.msra.mxu0 %v138
    %153 = vmatprep.subr.bf16.mxu0 0
    %154 = vmatpush1.bf16.msra.mxu0 %v139
    %155 = vmatprep.subr.bf16.mxu0 0
    %156 = vmatpush1.bf16.msra.mxu0 %v140
    %157 = vmatprep.subr.bf16.mxu0 0
    %158 = vmatpush1.bf16.msra.mxu0 0
    %159 = vmatprep.subr.bf16.mxu0 0
    %160 = vmatpush1.bf16.msra.mxu0 0
    %161 = vmatprep.subr.bf16.mxu0 0
    %162 = vmatpush1.bf16.msra.mxu0 0
    %163 = vmatprep.subr.bf16.mxu0 0
    %164 = vmatpush1.bf16.msra.mxu0 0
    %165 = vmatprep.subr.bf16.mxu0 0
    %166 = vmatpush1.bf16.msra.mxu0 0
    %167 = vmatprep.subr.bf16.mxu0 0
    %168 = vmatpush1.bf16.msra.mxu0 0
    %169 = vmatprep.subr.bf16.mxu0 0
    %170 = vmatpush1.bf16.msra.mxu0 0
    %171 = vmatprep.subr.bf16.mxu0 0
    %172 = vmatpush1.bf16.msra.mxu0 0
    %173 = vmatprep.subr.bf16.mxu0 0
    %174 = vmatpush1.bf16.msra.mxu0 0
    %175 = vmatprep.subr.bf16.mxu0 0
    %176 = vmatpush1.bf16.msra.mxu0 0
    %177 = vmatprep.subr.bf16.mxu0 0
    %178 = vmatpush1.bf16.msra.mxu0 0
    %179 = vmatprep.subr.bf16.mxu0 0
    %180 = vmatpush1.bf16.msra.mxu0 0
    %181 = vmatprep.mubr.bf16.mxu0 0
    %182 = vmatmul.mubr.bf16.gmra.mrb[0].mxu0 %v147
    %v183 = vpop.f32.mrb[0].mxu0
    %v184 = vadd.f32 0.0, %v183
    %v185 = vpop.f32.mrb[0].mxu0
    %v186 = vpop.f32.mrb[0].mxu0
    %v187 = vadd.f32 0.0, %v186
    %v188 = vpop.f32.mrb[0].mxu0
    %189 = vdwg.mxu0
    %v190 = vadd.f32 %v110, %v184
    %v191 = vadd.f32 %v111, %v187
    %192 = vst.msk [vmem:[#allocation2] sm:$0xff] %vm55, %v190
    %193 = vst.msk [vmem:[#allocation2 + $0x8] sm:$0xff] %vm55, %v191
    // Predicated region
    $region26: #{mlp_block.1} parent=1 // pred_check
      %p194 = pneg %p22
    $region27: #{mlp_block.1} parent=1 // pred_check_branch
      %196 = sbr.rel (%p194) target = $region29
    $region28: #{mlp_block.1} parent=1 // pred_region
      %v197 = vld [vmem:[#allocation2] sm:$0xff]
      %v198 = vld [vmem:[#allocation2 + $0x8] sm:$0xff]
      %v199 = vld [vmem:[%s4] sm:$0x1]
      %v201 = vlaneseq
      %v202 = vshrl.u32 %v201, 7
      %v203 = vsub.s32 0, %v202
      %v204 = vrot.slane %v199, %v203
      %v206 = vadd.f32 %v197, %v204
      %v207 = vadd.f32 %v198, %v204
      %208 = vst.msk [vmem:[#allocation3] sm:$0xff] %vm55, %v206
      %209 = vst.msk [vmem:[#allocation3 + $0x8] sm:$0xff] %vm55, %v207
    $region29: #{mlp_block.1} parent=1 // pred_fallthru
      _
    // Predicated region
    $region30: #{mlp_block.1} parent=1 // pred_check
      _
    $region31: #{mlp_block.1} parent=1 // pred_check_branch
      %211 = sbr.rel (0) target = $region33
    $region32: #{mlp_block.1} parent=1 // pred_region
      %s213 = ssub.s32 256, 256
      %214 = vsyncadd [#allocation4], %s213
      %s215 = sshll.u32 [#allocation3], 4
      %s216 = int_to_ptr.vmem [resolvable:$true] %s215
      %221 = dma.vmem_to_hbm [thread:$0]  %s216, 256, %s5, [#allocation4], 128, 128, 8
    $region33: #{mlp_block.1} parent=1 // pred_fallthru
      _
    // Predicated region
    $region34: #{mlp_block.1} parent=1 // pred_check
      _
    $region35: #{mlp_block.1} parent=1 // pred_check_branch
      %223 = sbr.rel (0) target = $region37
    $region36: #{mlp_block.1} parent=1 // pred_region
      %224 = dma.done [#allocation4], 256
    $region37: #{mlp_block.1} parent=1 // pred_fallthru
      _
    %225 = vsyncpa [#allocation4], 1

</llo_original>
